<compile_context>
chip_gen: v6e
topology: v6e:2x2x1
jax: 0.10.0
libtpu: 0.0.40
codegen_flags: <defaults>
</compile_context>

<pallas_src>
import jax
import jax.numpy as jnp
from jax.experimental import pallas as pl
from jax.experimental.pallas import tpu as pltpu


LRELU_SLOPE = 0.2


def _conv_lrelu_kernel(w_ref, p_ref, o_ref):
    # w_ref: [F_mxu, Kd]    bf16 weight, constant block index -> VMEM resident
    # p_ref: [1, Kd, TM]    bf16 patch tile (Kd = padded Cin*K*K, TM mult of 128)
    # o_ref: [1, F_out, TM] output tile; last dim TM -> lane-dense stores
    acc = jnp.dot(w_ref[...], p_ref[0], preferred_element_type=jnp.float32)
    y = jnp.where(acc > 0, acc, LRELU_SLOPE * acc)          # LeakyReLU on f32 acc
    f_out = o_ref.shape[1]
    if y.shape[0] != f_out:                                  # drop MXU-only F pad rows
        y = y[:f_out, :]
    o_ref[0] = y.astype(o_ref.dtype)


def _round_up(x, m):
    return (x + m - 1) // m * m


def _vmem_budget_bytes():
    """75% of the per-core VMEM capacity (48 MiB on v7x, 96 MiB on v5e/v6e)."""
    cap = 64 * 1024 * 1024
    try:
        info = pltpu.get_tpu_info()
        cap = int(getattr(info, "vmem_capacity_bytes", cap))
    except Exception:
        pass
    return (cap * 3) // 4


def _tile_vmem_bytes(tm, kd, f_mxu, f_out, in_isz, out_isz):
    patch = 2 * kd * tm * in_isz       # streamed patch tile, double-buffered
    wgt = f_mxu * kd * in_isz          # resident weight, single-buffered
    outb = 2 * f_out * tm * out_isz    # output tile, double-buffered
    acc = 2 * f_mxu * tm * 4           # f32 accumulator / LeakyReLU temps
    return patch + wgt + outb + acc


def _pick_tile_m(m_b, kd, f_mxu, f_out, in_isz, out_isz, target, budget):
    """Largest multiple of 128 <= target that divides round_up(m_b,128) and fits VMEM."""
    m_pad = _round_up(m_b, 128)
    tm = 128
    cand = max(128, min((target // 128) * 128, m_pad))
    while cand >= 128:
        if m_pad % cand == 0 and _tile_vmem_bytes(cand, kd, f_mxu, f_out, in_isz, out_isz) <= budget:
            tm = cand
            break
        cand -= 128
    return tm, m_pad


def _resident_spec(block_shape, index_map):
    """Weight BlockSpec: constant index, single-buffered if supported."""
    try:
        return pl.BlockSpec(block_shape, index_map, pipeline_mode=pl.Buffered(1))
    except TypeError:  # older BlockSpec signature without pipeline_mode
        return pl.BlockSpec(block_shape, index_map)


def downsample_forward(x, weight, *, size=4, stride=2, padding=1,
                       compute_dtype=jnp.bfloat16, out_dtype=jnp.bfloat16,
                       tile_m=1024):
    """
    x:      [B, Cin, H, W]  (NCHW, like PyTorch)
    weight: [F, Cin, K, K]  (PyTorch Conv2d weight layout, no bias)
    returns [B, F, H_out, W_out] in `out_dtype` (pass out_dtype=x.dtype to match
    the PyTorch module's dtype exactly).
    """
    B, Cin, H, W = x.shape
    F_out = weight.shape[0]
    K = size
    H_out = (H + 2 * padding - K) // stride + 1
    W_out = (W + 2 * padding - K) // stride + 1
    Kdim = Cin * K * K
    M_b = H_out * W_out

    # --- XLA glue: tap-major im2col directly in NCHW (no layout transposes) ---
    # patches[b, (kh*K+kw)*Cin + cin, oh*W_out + ow] = x_pad[b, cin, 2*oh+kh, 2*ow+kw]
    xb = x.astype(compute_dtype)
    xp = jnp.pad(xb, ((0, 0), (0, 0), (padding, padding), (padding, padding)))
    cols = []
    for kh in range(K):
        for kw in range(K):
            cols.append(xp[:, :, kh:kh + stride * H_out:stride,
                              kw:kw + stride * W_out:stride])   # [B, Cin, H_out, W_out]
    patches = jnp.concatenate(cols, axis=1).reshape(B, Kdim, M_b)

    # Weight reordered to match the (kh, kw, cin) tap-major patch ordering.
    w_mat = weight.transpose(0, 2, 3, 1).reshape(F_out, Kdim).astype(compute_dtype)

    # --- contraction-dim padding (lane dim of the resident weight tile) ---
    Kd = _round_up(Kdim, 128) if Kdim < 128 else _round_up(Kdim, 16)
    if Kd != Kdim:
        patches = jnp.pad(patches, ((0, 0), (0, Kd - Kdim), (0, 0)))
        w_mat = jnp.pad(w_mat, ((0, 0), (0, Kd - Kdim)))

    # Sublane-align the MXU M dim (weight rows); extra rows are sliced in-kernel.
    F_mxu = _round_up(F_out, 8)
    if F_mxu != F_out:
        w_mat = jnp.pad(w_mat, ((0, F_mxu - F_out), (0, 0)))

    # --- tile selection against the per-generation VMEM budget ---
    in_isz = jnp.dtype(compute_dtype).itemsize
    out_isz = jnp.dtype(out_dtype).itemsize
    budget = _vmem_budget_bytes()
    tm, M_pad = _pick_tile_m(M_b, Kd, F_mxu, F_out, in_isz, out_isz, tile_m, budget)
    if M_pad != M_b:
        patches = jnp.pad(patches, ((0, 0), (0, 0), (0, M_pad - M_b)))
    grid_m = M_pad // tm

    # v7x megacore: prefer >= 2 grid steps so both TensorCores get work.
    if B * grid_m < 2:
        half = tm // 2
        if half >= 128 and half % 128 == 0 and M_pad % half == 0:
            tm = half
            grid_m = M_pad // tm

    cost = pl.CostEstimate(
        flops=2 * B * M_pad * Kd * F_mxu,
        transcendentals=0,
        bytes_accessed=(B * Kd * M_pad * in_isz
                        + F_mxu * Kd * in_isz
                        + B * F_out * M_pad * out_isz),
    )

    out_flat = pl.pallas_call(
        _conv_lrelu_kernel,
        out_shape=jax.ShapeDtypeStruct((B, F_out, M_pad), out_dtype),
        grid_spec=pltpu.PrefetchScalarGridSpec(
            num_scalar_prefetch=0,
            grid=(B, grid_m),
            in_specs=[
                _resident_spec((F_mxu, Kd), lambda b, i: (0, 0)),      # resident weight
                pl.BlockSpec((1, Kd, tm), lambda b, i: (b, 0, i)),     # streamed patches
            ],
            out_specs=pl.BlockSpec((1, F_out, tm), lambda b, i: (b, 0, i)),
        ),
        compiler_params=pltpu.CompilerParams(
            dimension_semantics=("parallel", "parallel"),
            vmem_limit_bytes=budget,
        ),
        cost_estimate=cost,
    )(w_mat, patches)

    # Channel-first already; only trim ragged spatial padding (no-op when aligned).
    out = out_flat[:, :, :M_b].reshape(B, F_out, H_out, W_out)
    return out


def _reference(x, weight, *, stride=2, padding=1,
               compute_dtype=jnp.bfloat16, out_dtype=jnp.bfloat16):
    """Pure-JAX reference (XLA conv, same bf16-in / f32-accum / bf16-out recipe)."""
    y = jax.lax.conv_general_dilated(
        x.astype(compute_dtype), weight.astype(compute_dtype),
        window_strides=(stride, stride),
        padding=((padding, padding), (padding, padding)),
        dimension_numbers=("NCHW", "OIHW", "NCHW"),
        preferred_element_type=jnp.float32,
    )
    y = jnp.where(y > 0, y, LRELU_SLOPE * y)
    return y.astype(out_dtype)


if __name__ == "__main__":
    key = jax.random.PRNGKey(0)
    k_x, k_w = jax.random.split(key)

    # Small shapes consistent with the module's forward: NCHW input.
    B, Cin, H, W = 2, 4, 16, 16
    filters, size = 32, 4

    x = jax.random.normal(k_x, (B, Cin, H, W), dtype=jnp.float32)
    # Deterministic synthetic Conv2d weight: [filters, Cin, K, K], no bias.
    weight = jax.random.normal(k_w, (filters, Cin, size, size), dtype=jnp.float32) * 0.1

    out = downsample_forward(x, weight, size=size, stride=2, padding=1)
    out = jax.block_until_ready(out)

    ref = jax.block_until_ready(_reference(x, weight))
    assert out.shape == (B, filters, H // 2, W // 2), out.shape

    out_f32 = out.astype(jnp.float32)
    ref_f32 = ref.astype(jnp.float32)
    max_err = float(jnp.max(jnp.abs(out_f32 - ref_f32)))
    assert jnp.allclose(out_f32, ref_f32, atol=2e-2, rtol=2e-2), max_err

    print("KERNEL_OK")
</pallas_src>

<mosaic_0001>
module attributes {stable_mosaic.version = 11 : i64} {
  func.func @_conv_lrelu_kernel(%arg0: i32, %arg1: i32, %arg2: memref<32x128xbf16, #tpu.memory_space<vmem>>, %arg3: memref<1x128x128xbf16, #tpu.memory_space<vmem>>, %arg4: memref<1x32x128xbf16, #tpu.memory_space<vmem>>) attributes {dimension_semantics = [#tpu.dimension_semantics<parallel>, #tpu.dimension_semantics<parallel>], iteration_bounds = array<i64: 2, 1>, scalar_prefetch = 0 : i64, scratch_operands = 0 : i64, tpu.core_type = #tpu.core_type<tc>, window_params = [{pipeline_mode = #tpu.pipeline_mode<synchronous>, transform_indices = @transform_0, window_bounds = array<i64: 32, 128>}, {transform_indices = @transform_1, window_bounds = array<i64: 1, 128, 128>}, {transform_indices = @transform_2, window_bounds = array<i64: 1, 32, 128>}]} {
    %c0 = arith.constant 0 : index
    %c0_0 = arith.constant 0 : index
    %0 = vector.load %arg2[%c0, %c0_0] : memref<32x128xbf16, #tpu.memory_space<vmem>>, vector<32x128xbf16>
    %c0_1 = arith.constant 0 : index
    %c0_2 = arith.constant 0 : index
    %c0_3 = arith.constant 0 : index
    %1 = vector.load %arg3[%c0_1, %c0_2, %c0_3] : memref<1x128x128xbf16, #tpu.memory_space<vmem>>, vector<1x128x128xbf16>
    %2 = vector.shape_cast %1 : vector<1x128x128xbf16> to vector<128x128xbf16>
    %cst = arith.constant dense<0.000000e+00> : vector<32x128xf32>
    %3 = tpu.matmul %0, %2, %cst {dimension_numbers = #tpu.dot_dimension_numbers<[1], [0], [0], [1], [0, 0, 1, 1], [], []>} : vector<32x128xbf16>, vector<128x128xbf16>, vector<32x128xf32> -> vector<32x128xf32>
    %cst_4 = arith.constant 0.000000e+00 : f32
    %4 = vector.broadcast %cst_4 : f32 to vector<32x128xf32>
    %5 = arith.cmpf ogt, %3, %4 : vector<32x128xf32>
    %cst_5 = arith.constant 2.000000e-01 : f32
    %6 = vector.broadcast %cst_5 : f32 to vector<32x128xf32>
    %7 = arith.mulf %6, %3 : vector<32x128xf32>
    %8 = arith.select %5, %3, %7 : vector<32x128xi1>, vector<32x128xf32>
    %9 = arith.truncf %8 : vector<32x128xf32> to vector<32x128xbf16>
    %c0_6 = arith.constant 0 : index
    %c0_7 = arith.constant 0 : index
    %c0_8 = arith.constant 0 : index
    %10 = vector.load %arg4[%c0_6, %c0_7, %c0_8] : memref<1x32x128xbf16, #tpu.memory_space<vmem>>, vector<1x32x128xbf16>
    %11 = vector.shape_cast %10 : vector<1x32x128xbf16> to vector<32x128xbf16>
    %12 = vector.shape_cast %9 : vector<32x128xbf16> to vector<1x32x128xbf16>
    tpu.vector_store %arg4[%c0_6, %c0_7, %c0_8], %12 {strides = array<i32>} : memref<1x32x128xbf16, #tpu.memory_space<vmem>>, vector<1x32x128xbf16>,
    return
  }
  func.func @transform_0(%arg0: i32, %arg1: i32) -> (i32, i32) {
    %c0_i32 = arith.constant 0 : i32
    %c0_i32_0 = arith.constant 0 : i32
    %c0_i32_1 = arith.constant 0 : i32
    return %c0_i32, %c0_i32_0 : i32, i32
  }
  func.func @transform_1(%arg0: i32, %arg1: i32) -> (i32, i32, i32) {
    %c0_i32 = arith.constant 0 : i32
    %c0_i32_0 = arith.constant 0 : i32
    return %arg0, %c0_i32, %arg1 : i32, i32, i32
  }
  func.func @transform_2(%arg0: i32, %arg1: i32) -> (i32, i32, i32) {
    %c0_i32 = arith.constant 0 : i32
    %c0_i32_0 = arith.constant 0 : i32
    return %arg0, %c0_i32, %arg1 : i32, i32, i32
  }
}

</mosaic_0001>

<llo_original>
// kernel: tpu_custom_call.1
$region0: #{tpu_custom_call.1}
  #allocation0 [shape = 'u32[]', space=smem, size = 0x4, offset = 0x4, fixed_abs, tag = 'smem constant byte address 0x4 - core index']
  #allocation1 [shape = 'u32[144,128]{1,0:T(1,128)}', space=vmem, size = 0x12000, scoped, tag = 'internal scratch']
  %s0 = inlined_call_operand.hbm [shape: bf16[32,128], index: 0, kind: input, shape index: {}]
  %s1 = inlined_call_operand.hbm [shape: bf16[2,128,128], index: 1, kind: input, shape index: {}]
  %s2 = inlined_call_operand.hbm [shape: bf16[2,32,128], index: 2, kind: output, shape index: {}]
  %s3 = sld [smem:[#allocation0]]
  $region49: #{tpu_custom_call.1} parent=0
    _
  %s5 = ssub.s32 1, %s3
  %s6 = scalar_select 0, %s5, %s3
  $region1: #{tpu_custom_call.1} parent=0
    #allocation2 [shape = 'u8[8192]{0}', space=vmem, size = 0x2000, scoped, tag = 'input window, operand 0, single buffered']
    #allocation3 [shape = 's32[2]{0}', space=sflag, size = 0x8, scoped, tag = 'scoped memory for tpu_custom_call.1']
    #allocation4 [shape = 's32[2]{0}', space=sflag, size = 0x8, scoped, tag = 'scoped memory for tpu_custom_call.1']
    #allocation5 [shape = 'u8[65536]{0}', space=vmem, size = 0x10000, scoped, tag = 'input window, operand 1']
    #allocation6 [shape = 's32[2]{0}', space=sflag, size = 0x8, scoped, tag = 'scoped memory for tpu_custom_call.1']
    #allocation7 [shape = 'u8[16384]{0}', space=vmem, size = 0x4000, scoped, tag = 'output window, operand 0']
    %7 = vsyncpa [#allocation3], 0
    %8 = vsyncpa [#allocation6], 0
    %s9 = scalar_lea.sflag [#allocation6], 1
    %10 = vsyncpa %s9, 0
    %11 = vsyncpa [#allocation4], 0
    %s12 = scalar_lea.sflag [#allocation4], 1
    %13 = vsyncpa %s12, 0
    loop: start=0, step=1, limit=4
    $region2: #{tpu_custom_call.1} parent=1 // loop_pre_header
      _
    $region3: #{tpu_custom_call.1} parent=1 // loop_header
      %s15 = sphi 0, %s19
      %p16 = scmp.ge.s32.totalorder %s15, 4
      %s22 = sphi 0, %s34
      %s23 = sphi 0, %s30
      %s24 = sphi 0, %s22
      %s25 = sphi 0, %s23
      %s26 = sphi 0, %s24
      %s27 = sphi 0, %s25
      %s35 = sphi 0, %s35
      %s37 = sphi 0, %s35
      %s38 = sphi 0, %s37
      %s52 = sphi 0, %s38
      %s60 = sphi 0, %s62
      %s63 = sphi 0, %s60
      %s64 = sphi 0, %s63
      %s80 = sphi 0, %s64
      %s88 = sphi 0, %s90
      %s91 = sphi 0, %s88
      %s92 = sphi 0, %s91
      %s108 = sphi 0, %s92
    $region4: #{tpu_custom_call.1} parent=1 // loop_header_branch
      %18 = sbr.rel (%p16) target = $region8
    $region5: #{tpu_custom_call.1} parent=1 // loop_body
      %s20 = ssub.s32 %s15, 1
      %s21 = ssub.s32 %s15, 2
      %s28 = sadd.s32 1, %s23
      %p29 = scmp.ge.s32.totalorder %s28, 1
      %s30 = scalar_select %p29, 0, %s28
      %s31 = sadd.s32 1, %s22
      %s32 = scalar_select %p29, %s31, %s22
      %p33 = scmp.ge.s32.totalorder %s32, 2
      %s34 = scalar_select %p33, 0, %s32
      %s36 = sadd.s32 %s35, 1
      %p39 = scmp.eq.s32.totalorder %s15, 1
      %p40 = scmp.ne.s32.totalorder %s35, %s37
      %p41 = scmp.eq.s32.totalorder %s15, 0
      %p42 = por %p40, %p41
      %p43 = scmp.ne.s32.totalorder %s35, %s37
      %p44 = scmp.eq.s32.totalorder %s20, 1
      %p45 = por %p43, %p44
      %p46 = scmp.ne.s32.totalorder %s37, %s38
      %p47 = scmp.eq.s32.totalorder %s20, 0
      %p48 = por %p46, %p47
      %p49 = scmp.ne.s32.totalorder %s37, %s38
      %p50 = scmp.eq.s32.totalorder %s21, 1
      %p51 = por %p49, %p50
      %p53 = scmp.ne.s32.totalorder %s38, %s52
      %p54 = scmp.eq.s32.totalorder %s21, 0
      %p55 = por %p53, %p54
      %s56 = ssub.s32 %s22, %s34
      %s57 = ssub.s32 %s23, %s30
      %s58 = sor.u32 %s56, %s57
      %p59 = scmp.eq.s32.totalorder %s58, 0
      %s61 = sadd.s32 %s60, 1
      %s62 = scalar_select %p59, %s60, %s61
      %p65 = pneg %p59
      %p66 = scmp.eq.s32.totalorder %s15, 1
      %p67 = por %p65, %p66
      %p68 = scmp.ne.s32.totalorder %s60, %s63
      %p69 = scmp.eq.s32.totalorder %s15, 0
      %p70 = por %p68, %p69
      %p71 = scmp.ne.s32.totalorder %s60, %s63
      %p72 = scmp.eq.s32.totalorder %s20, 1
      %p73 = por %p71, %p72
      %p74 = scmp.ne.s32.totalorder %s63, %s64
      %p75 = scmp.eq.s32.totalorder %s20, 0
      %p76 = por %p74, %p75
      %p77 = scmp.ne.s32.totalorder %s63, %s64
      %p78 = scmp.eq.s32.totalorder %s21, 1
      %p79 = por %p77, %p78
      %p81 = scmp.ne.s32.totalorder %s64, %s80
      %p82 = scmp.eq.s32.totalorder %s21, 0
      %p83 = por %p81, %p82
      %s84 = ssub.s32 %s22, %s34
      %s85 = ssub.s32 %s23, %s30
      %s86 = sor.u32 %s84, %s85
      %p87 = scmp.eq.s32.totalorder %s86, 0
      %s89 = sadd.s32 %s88, 1
      %s90 = scalar_select %p87, %s88, %s89
      %p93 = pneg %p87
      %p94 = scmp.eq.s32.totalorder %s15, 1
      %p95 = por %p93, %p94
      %p96 = scmp.ne.s32.totalorder %s88, %s91
      %p97 = scmp.eq.s32.totalorder %s15, 0
      %p98 = por %p96, %p97
      %p99 = scmp.ne.s32.totalorder %s88, %s91
      %p100 = scmp.eq.s32.totalorder %s20, 1
      %p101 = por %p99, %p100
      %p102 = scmp.ne.s32.totalorder %s91, %s92
      %p103 = scmp.eq.s32.totalorder %s20, 0
      %p104 = por %p102, %p103
      %p105 = scmp.ne.s32.totalorder %s91, %s92
      %p106 = scmp.eq.s32.totalorder %s21, 1
      %p107 = por %p105, %p106
      %p109 = scmp.ne.s32.totalorder %s92, %s108
      %p110 = scmp.eq.s32.totalorder %s21, 0
      %p111 = por %p109, %p110
      %p112 = scmp.le.s32.totalorder 1, %s15
      %p113 = scmp.lt.s32.totalorder %s15, 3
      %p114 = pnand %p112, %p113
      %p115 = pneg %p114
      // Predicated region
      $region9: #{tpu_custom_call.1} parent=5 // pred_check
        _
      $region10: #{tpu_custom_call.1} parent=5 // pred_check_branch
        %117 = sbr.rel (%p114) target = $region12
      $region11: #{tpu_custom_call.1} parent=5 // pred_region
        %s118 = ssub.s32 %s15, 1
        // Predicated region
        $region13: #{tpu_custom_call.1} parent=11 // pred_check
          %p119 = pneg %p48
        $region14: #{tpu_custom_call.1} parent=11 // pred_check_branch
          %121 = sbr.rel (%p119) target = $region16
        $region15: #{tpu_custom_call.1} parent=11 // pred_region
          %s123 = ssub.s32 256, 256
          %124 = vsyncadd [#allocation3], %s123
          %s125 = sshll.u32 [#allocation2], 4
          %s126 = int_to_ptr.vmem [resolvable:$true] %s125
          %131 = dma.hbm_to_vmem [thread:$0]  %s0, 256, %s126, [#allocation3], 64, 64, 4
        $region16: #{tpu_custom_call.1} parent=11 // pred_fallthru
          _
      $region12: #{tpu_custom_call.1} parent=5 // pred_fallthru
        _
      %p132 = scmp.lt.s32.totalorder %s15, 2
      // Predicated region
      $region17: #{tpu_custom_call.1} parent=5 // pred_check
        %p133 = pneg %p132
      $region18: #{tpu_custom_call.1} parent=5 // pred_check_branch
        %135 = sbr.rel (%p133) target = $region20
      $region19: #{tpu_custom_call.1} parent=5 // pred_region
        // Predicated region
        $region21: #{tpu_custom_call.1} parent=19 // pred_check
          %p136 = pneg %p70
        $region22: #{tpu_custom_call.1} parent=19 // pred_check_branch
          %138 = sbr.rel (%p136) target = $region24
        $region23: #{tpu_custom_call.1} parent=19 // pred_region
          %s139 = sand.u32 %s60, 1
          %s140 = scalar_lea.sflag [#allocation6], %s139
          %s141 = sand.u32 %s60, 1
          %s142 = smul.addr %s141, 64
          %s143 = scalar_lea.vmem [#allocation5], %s142
          %s145 = ssub.s32 1024, 1024
          %146 = vsyncadd %s140, %s145
          %s147 = smul.addr %s22, 16
          %s148 = sadd.s32 %s23, %s147
          %s149 = smul.addr %s148, 64
          %s150 = scalar_lea.hbm %s1, %s149
          %s151 = sshll.u32 %s143, 4
          %s152 = int_to_ptr.vmem [resolvable:$true] %s151
          %157 = dma.hbm_to_vmem [thread:$0]  %s150, 1024, %s152, %s140, 64, 64, 4
        $region24: #{tpu_custom_call.1} parent=19 // pred_fallthru
          _
      $region20: #{tpu_custom_call.1} parent=5 // pred_fallthru
        _
      %p158 = scmp.le.s32.totalorder 1, %s15
      %p159 = scmp.lt.s32.totalorder %s15, 3
      %p160 = pnand %p158, %p159
      %p161 = pneg %p160
      // Predicated region
      $region25: #{tpu_custom_call.1} parent=5 // pred_check
        _
      $region26: #{tpu_custom_call.1} parent=5 // pred_check_branch
        %163 = sbr.rel (%p160) target = $region28
      $region27: #{tpu_custom_call.1} parent=5 // pred_region
        %s164 = ssub.s32 %s15, 1
        // Predicated region
        $region29: #{tpu_custom_call.1} parent=27 // pred_check
          %p165 = pneg %p48
        $region30: #{tpu_custom_call.1} parent=27 // pred_check_branch
          %167 = sbr.rel (%p165) target = $region32
        $region31: #{tpu_custom_call.1} parent=27 // pred_region
          %168 = dma.done [#allocation3], 256
        $region32: #{tpu_custom_call.1} parent=27 // pred_fallthru
          _
        %s169 = sand.u32 %s63, 1
        %s170 = scalar_lea.sflag [#allocation6], %s169
        %s171 = sand.u32 %s63, 1
        %s172 = smul.addr %s171, 64
        %s173 = scalar_lea.vmem [#allocation5], %s172
        // Predicated region
        $region33: #{tpu_custom_call.1} parent=27 // pred_check
          %p174 = pneg %p76
        $region34: #{tpu_custom_call.1} parent=27 // pred_check_branch
          %176 = sbr.rel (%p174) target = $region36
        $region35: #{tpu_custom_call.1} parent=27 // pred_region
          %177 = dma.done %s170, 1024
        $region36: #{tpu_custom_call.1} parent=27 // pred_fallthru
          _
        %p178 = pneg %p48
        %p179 = pneg %p45
        %s180 = sand.u32 %s63, 1
        %s181 = scalar_lea.sflag [#allocation6], %s180
        %s182 = sand.u32 %s63, 1
        %s183 = smul.addr %s182, 64
        %s184 = scalar_lea.vmem [#allocation5], %s183
        %p185 = pneg %p76
        %p186 = pneg %p73
        %p187 = pneg %p104
        %p188 = pneg %p101
        %s189 = sand.u32 %s91, 1
        %s190 = scalar_lea.sflag [#allocation4], %s189
        %s191 = sand.u32 %s91, 1
        %s192 = smul.addr %s191, 16
        %s193 = scalar_lea.vmem [#allocation7], %s192
        %v195 = vld [vmem:[#allocation2] sm:$0xf]
        %v196 = vld [vmem:[#allocation2 + $0x4] sm:$0xf]
        %v197 = vld [vmem:[#allocation2 + $0x8] sm:$0xf]
        %v198 = vld [vmem:[#allocation2 + $0xc] sm:$0xf]
        %v199 = vld [vmem:[%s173] sm:$0xf]
        %v200 = vld [vmem:[%s173 + $0x4] sm:$0xf]
        %v201 = vld [vmem:[%s173 + $0x8] sm:$0xf]
        %v202 = vld [vmem:[%s173 + $0xc] sm:$0xf]
        %v203 = vld [vmem:[%s173 + $0x10] sm:$0xf]
        %v204 = vld [vmem:[%s173 + $0x14] sm:$0xf]
        %v205 = vld [vmem:[%s173 + $0x18] sm:$0xf]
        %v206 = vld [vmem:[%s173 + $0x1c] sm:$0xf]
        %v207 = vld [vmem:[%s173 + $0x20] sm:$0xf]
        %v208 = vld [vmem:[%s173 + $0x24] sm:$0xf]
        %v209 = vld [vmem:[%s173 + $0x28] sm:$0xf]
        %v210 = vld [vmem:[%s173 + $0x2c] sm:$0xf]
        %v211 = vld [vmem:[%s173 + $0x30] sm:$0xf]
        %v212 = vld [vmem:[%s173 + $0x34] sm:$0xf]
        %v213 = vld [vmem:[%s173 + $0x38] sm:$0xf]
        %v214 = vld [vmem:[%s173 + $0x3c] sm:$0xf]
        %v219 = vunpack.c.l.b16 %v195
        %v220 = vunpack.c.l.b16 %v196
        %v221 = vunpack.c.l.b16 %v197
        %v222 = vunpack.c.l.b16 %v198
        %v223 = vpack.c.b16 %v220, %v219
        %v224 = vpack.c.b16 %v222, %v221
        %v243 = vunpack.c.l.b16 %v199
        %v244 = vunpack.c.l.b16 %v200
        %v245 = vunpack.c.l.b16 %v201
        %v246 = vunpack.c.l.b16 %v202
        %v247 = vunpack.c.l.b16 %v203
        %v248 = vunpack.c.l.b16 %v204
        %v249 = vunpack.c.l.b16 %v205
        %v250 = vunpack.c.l.b16 %v206
        %v251 = vunpack.c.l.b16 %v207
        %v252 = vunpack.c.l.b16 %v208
        %v253 = vunpack.c.l.b16 %v209
        %v254 = vunpack.c.l.b16 %v210
        %v255 = vunpack.c.l.b16 %v211
        %v256 = vunpack.c.l.b16 %v212
        %v257 = vunpack.c.l.b16 %v213
        %v258 = vunpack.c.l.b16 %v214
        %v259 = vpack.c.b16 %v244, %v243
        %v260 = vpack.c.b16 %v246, %v245
        %v261 = vpack.c.b16 %v248, %v247
        %v262 = vpack.c.b16 %v250, %v249
        %v263 = vpack.c.b16 %v252, %v251
        %v264 = vpack.c.b16 %v254, %v253
        %v265 = vpack.c.b16 %v256, %v255
        %v266 = vpack.c.b16 %v258, %v257
        %275 = vmatprep.subr.bf16.mxu0 0
        %276 = vmatpush1.bf16.msra.mxu0 %v266
        %277 = vmatprep.subr.bf16.mxu0 0
        %278 = vmatpush1.bf16.msra.mxu0 %v265
        %279 = vmatprep.subr.bf16.mxu0 0
        %280 = vmatpush1.bf16.msra.mxu0 %v264
        %281 = vmatprep.subr.bf16.mxu0 0
        %282 = vmatpush1.bf16.msra.mxu0 %v263
        %283 = vmatprep.subr.bf16.mxu0 0
        %284 = vmatpush1.bf16.msra.mxu0 %v262
        %285 = vmatprep.subr.bf16.mxu0 0
        %286 = vmatpush1.bf16.msra.mxu0 %v261
        %287 = vmatprep.subr.bf16.mxu0 0
        %288 = vmatpush1.bf16.msra.mxu0 %v260
        %289 = vmatprep.subr.bf16.mxu0 0
        %290 = vmatpush1.bf16.msra.mxu0 %v259
        %291 = vmatprep.subr.bf16.mxu0 0
        %292 = vmatpush2.bf16.msra.mxu0 0
        %293 = vmatprep.subr.bf16.mxu0 0
        %294 = vmatpush2.bf16.msra.mxu0 0
        %295 = vmatprep.subr.bf16.mxu0 0
        %296 = vmatpush2.bf16.msra.mxu0 0
        %297 = vmatprep.subr.bf16.mxu0 0
        %298 = vmatpush2.bf16.msra.mxu0 0
        %299 = vmatprep.subr.bf16.mxu0 0
        %300 = vmatpush2.bf16.msra.mxu0 0
        %301 = vmatprep.subr.bf16.mxu0 0
        %302 = vmatpush2.bf16.msra.mxu0 0
        %303 = vmatprep.subr.bf16.mxu0 0
        %304 = vmatpush2.bf16.msra.mxu0 0
        %305 = vmatprep.subr.bf16.mxu0 0
        %306 = vmatpush2.bf16.msra.mxu0 0
        %307 = vmatprep.mubr.bf16.mxu0 0
        %308 = vmatmul.mubr.bf16.gmra.mxu0 %v223
        %v309 = vpop.f32.mrf.mxu0
        %v310 = vadd.f32 0.0, %v309
        %v311 = vpop.f32.mrf.mxu0
        %v312 = vpop.f32.mrf.mxu0
        %v313 = vadd.f32 0.0, %v312
        %v314 = vpop.f32.mrf.mxu0
        %315 = vmatprep.mubr.bf16.mxu0 0
        %316 = vmatmul.mubr.bf16.gmra.mxu0 %v224
        %v317 = vpop.f32.mrf.mxu0
        %v318 = vadd.f32 0.0, %v317
        %v319 = vpop.f32.mrf.mxu0
        %v320 = vpop.f32.mrf.mxu0
        %v321 = vadd.f32 0.0, %v320
        %v322 = vpop.f32.mrf.mxu0
        %323 = vdwg.mxu0
        %vm324 = vcmp.gt.f32.partialorder %v310, 0.0
        %vm325 = vcmp.gt.f32.partialorder %v313, 0.0
        %vm326 = vcmp.gt.f32.partialorder %v318, 0.0
        %vm327 = vcmp.gt.f32.partialorder %v321, 0.0
        %v328 = vmul.f32 %v310, 0.2
        %v329 = vmul.f32 %v313, 0.2
        %v330 = vmul.f32 %v318, 0.2
        %v331 = vmul.f32 %v321, 0.2
        %v332 = vsel %vm324, %v310, %v328
        %v333 = vsel %vm325, %v313, %v329
        %v334 = vsel %vm326, %v318, %v330
        %v335 = vsel %vm327, %v321, %v331
        %v336 = vpack.c.bf16 %v333, %v332
        %v337 = vpack.c.bf16 %v335, %v334
        %v340 = vunpack.c.l.b16 %v336
        %v341 = vunpack.c.h.b16 %v336
        %v342 = vunpack.c.l.b16 %v337
        %v343 = vunpack.c.h.b16 %v337
        %v344 = vpack.c.b16 %v340, %v340
        %v345 = vpack.c.b16 %v341, %v341
        %v346 = vpack.c.b16 %v342, %v342
        %v347 = vpack.c.b16 %v343, %v343
        %352 = vst [vmem:[%s193] sm:$0xf] %v344
        %353 = vst [vmem:[%s193 + $0x4] sm:$0xf] %v345
        %354 = vst [vmem:[%s193 + $0x8] sm:$0xf] %v346
        %355 = vst [vmem:[%s193 + $0xc] sm:$0xf] %v347
        %s356 = sand.u32 %s91, 1
        %s357 = scalar_lea.sflag [#allocation4], %s356
        %s358 = sand.u32 %s91, 1
        %s359 = smul.addr %s358, 16
        %s360 = scalar_lea.vmem [#allocation7], %s359
        // Predicated region
        $region37: #{tpu_custom_call.1} parent=27 // pred_check
          %p361 = pneg %p101
        $region38: #{tpu_custom_call.1} parent=27 // pred_check_branch
          %363 = sbr.rel (%p361) target = $region40
        $region39: #{tpu_custom_call.1} parent=27 // pred_region
          %s365 = ssub.s32 256, 256
          %366 = vsyncadd %s357, %s365
          %s367 = smul.addr %s24, 4
          %s368 = sadd.s32 %s25, %s367
          %s369 = smul.addr %s368, 64
          %s370 = scalar_lea.hbm %s2, %s369
          %s371 = sshll.u32 %s360, 4
          %s372 = int_to_ptr.vmem [resolvable:$true] %s371
          %377 = dma.vmem_to_hbm [thread:$0]  %s372, 256, %s370, %s357, 64, 64, 4
        $region40: #{tpu_custom_call.1} parent=27 // pred_fallthru
          _
      $region28: #{tpu_custom_call.1} parent=5 // pred_fallthru
        _
      %p378 = scmp.le.s32.totalorder 2, %s15
      // Predicated region
      $region41: #{tpu_custom_call.1} parent=5 // pred_check
        %p379 = pneg %p378
      $region42: #{tpu_custom_call.1} parent=5 // pred_check_branch
        %381 = sbr.rel (%p379) target = $region44
      $region43: #{tpu_custom_call.1} parent=5 // pred_region
        %s382 = ssub.s32 %s15, 2
        // Predicated region
        $region45: #{tpu_custom_call.1} parent=43 // pred_check
          %p383 = pneg %p107
        $region46: #{tpu_custom_call.1} parent=43 // pred_check_branch
          %385 = sbr.rel (%p383) target = $region48
        $region47: #{tpu_custom_call.1} parent=43 // pred_region
          %s386 = sand.u32 %s92, 1
          %s387 = scalar_lea.sflag [#allocation4], %s386
          %s388 = sand.u32 %s92, 1
          %s389 = smul.addr %s388, 16
          %s390 = scalar_lea.vmem [#allocation7], %s389
          %391 = dma.done %s387, 256
        $region48: #{tpu_custom_call.1} parent=43 // pred_fallthru
          _
      $region44: #{tpu_custom_call.1} parent=5 // pred_fallthru
        _
    $region6: #{tpu_custom_call.1} parent=1 // loop_footer
      %s19 = sadd.s32 1, %s15
    $region7: #{tpu_custom_call.1} parent=1 // loop_footer_branch
      %14 = sbr.rel target = $region3
    $region8: #{tpu_custom_call.1} parent=1 // loop_exit
      _
    %392 = vsyncpa [#allocation3], 1
    %s393 = scalar_lea.sflag [#allocation3], 1
    %394 = vsyncpa %s393, 1
    %395 = vsyncpa [#allocation6], 1
    %s396 = scalar_lea.sflag [#allocation6], 1
    %397 = vsyncpa %s396, 1
    %398 = vsyncpa [#allocation4], 1
    %s399 = scalar_lea.sflag [#allocation4], 1
    %400 = vsyncpa %s399, 1

</llo_original>
